<compile_context>
chip_gen: v7x
topology: tpu7x:2x2x1
jax: 0.10.0
libtpu: 0.0.40
codegen_flags: <defaults>
</compile_context>

<pallas_src>
import functools

import jax
import jax.numpy as jnp
from jax.experimental import pallas as pl
from jax.experimental.pallas import tpu as pltpu

D_MODEL = 768        # hardcoded in Adapter (torch.nn.Linear(768, 128))
D_BOTTLENECK = 128   # hardcoded in Adapter (torch.nn.Linear(128, 768))


def _round_up(n, m):
    return ((n + m - 1) // m) * m


def _gelu_tanh(x):
    # Tanh-approximate GELU: tanh goes to the EUP (separate VLIW slot), unlike
    # the long erf VPU polynomial.  Max abs deviation from exact GELU ~3e-3.
    c = jnp.asarray(0.7978845608028654, x.dtype)   # sqrt(2/pi)
    k = jnp.asarray(0.044715, x.dtype)
    return 0.5 * x * (1.0 + jnp.tanh(c * (x + k * x * x * x)))


def adapter_moe_kernel(task_ref, x_ref, w1_ref, b1_ref, w2_ref, b2_ref, o_ref,
                       *, bf16_epilogue):
    # task_ref is the scalar-prefetch arg (already consumed by the index_maps,
    # so the weight refs here are the selected expert's tiles).
    del task_ref
    x = x_ref[...]                                    # (tm, 768) f32 from HBM
    x_bf = x.astype(jnp.bfloat16)                     # in-VMEM cast for the MXU
    w1 = w1_ref[...].astype(jnp.bfloat16)             # (768, 128) resident tile
    b1 = b1_ref[...].astype(jnp.float32)              # (1, 128)
    h = jnp.dot(x_bf, w1, preferred_element_type=jnp.float32) + b1
    h = _gelu_tanh(h)                                 # (tm, 128) f32

    w2 = w2_ref[...].astype(jnp.bfloat16)             # (128, 768) resident tile
    b2 = b2_ref[...].astype(jnp.float32)              # (1, 768)
    h2 = jnp.dot(h.astype(jnp.bfloat16), w2,
                 preferred_element_type=jnp.float32) + b2

    if bf16_epilogue:
        # v6e / v7x: bf16-native VALU & EUP -> halve the (tm, 768) GELU +
        # residual work.  Output is bf16 anyway, so no extra rounding cost.
        h2 = _gelu_tanh(h2.astype(jnp.bfloat16))
        o_ref[...] = x_bf + h2
    else:
        # v5e and older: no bf16 VPU/EUP; keep elementwise math in f32 and use
        # the original f32 x on the residual path, cast once at the store.
        h2 = _gelu_tanh(h2)
        o_ref[...] = (x + h2).astype(o_ref.dtype)


@functools.partial(jax.jit, static_argnames=("tm", "bf16_epilogue"))
def _moe_forward_flat(x2, task_arr, w1, b1, w2, b2, *, tm, bf16_epilogue):
    M, D = x2.shape
    grid_m = pl.cdiv(M, tm)   # ragged last block is masked by Pallas (no padding)

    kernel = functools.partial(adapter_moe_kernel, bf16_epilogue=bf16_epilogue)

    return pl.pallas_call(
        kernel,
        out_shape=jax.ShapeDtypeStruct((M, D), jnp.bfloat16),
        grid_spec=pltpu.PrefetchScalarGridSpec(
            num_scalar_prefetch=1,
            grid=(grid_m,),
            in_specs=[
                # x rows, streamed f32, lane-dense 768 wide.
                pl.BlockSpec((tm, D), lambda i, t: (i, 0)),
                # Selected expert's weights/biases; leading expert dim squeezed,
                # constant index_map -> resident across the whole grid.
                pl.BlockSpec((None, D, D_BOTTLENECK), lambda i, t: (t[0], 0, 0)),
                pl.BlockSpec((None, 1, D_BOTTLENECK), lambda i, t: (t[0], 0, 0)),
                pl.BlockSpec((None, D_BOTTLENECK, D), lambda i, t: (t[0], 0, 0)),
                pl.BlockSpec((None, 1, D), lambda i, t: (t[0], 0, 0)),
            ],
            out_specs=pl.BlockSpec((tm, D), lambda i, t: (i, 0)),
        ),
        # Rows are independent -> let megacore (v7x) shard the grid.  No VMEM
        # limit override: footprint at tm<=512 fits every generation's default.
        compiler_params=pltpu.CompilerParams(
            dimension_semantics=("parallel",),
        ),
    )(task_arr, x2, w1, b1, w2, b2)


def _choose_tm(M, tm_cap):
    # Multiple of 8 (sublane), capped at tm_cap, and small enough that there are
    # at least 2 grid steps whenever M > 8 so both v7x TensorCores get work.
    half = _round_up(max((M + 1) // 2, 1), 8)
    return max(8, min(tm_cap, half))


def _default_bf16_epilogue():
    # bf16 elementwise epilogue only on generations with bf16-native VPU/EUP.
    try:
        kind = jax.devices()[0].device_kind.lower()
    except Exception:
        return True
    return not any(v in kind for v in ("v2", "v3", "v4", "v5"))


def moe_forward(x, task, w1, b1, w2, b2, *, tm=512, bf16_epilogue=None):
    """x: (B, L, 768) f32. task: python int. Stacked expert params:
    w1:(ntasks,768,128) b1:(ntasks,1,128) w2:(ntasks,128,768) b2:(ntasks,1,768).
    Returns (B, L, 768) bf16 (output stream intentionally bf16 — see header).
    On v6e with very large B*L, tm=1024 is a small extra win; 512 is the safe
    default across v5e/v6e/v7x.
    """
    B, L, D = x.shape
    assert D == D_MODEL
    M = B * L

    if bf16_epilogue is None:
        bf16_epilogue = _default_bf16_epilogue()
    tm_eff = _choose_tm(M, tm)

    x2 = x.reshape(M, D)
    task_arr = jnp.asarray([task], dtype=jnp.int32)
    out = _moe_forward_flat(x2, task_arr, w1, b1, w2, b2,
                            tm=tm_eff, bf16_epilogue=bool(bf16_epilogue))
    return out.reshape(B, L, D)


def reference_forward(x, task, w1, b1, w2, b2):
    h = jax.nn.gelu(x @ w1[task] + b1[task, 0], approximate=False)
    h = jax.nn.gelu(h @ w2[task] + b2[task, 0], approximate=False)
    return x + h


if __name__ == "__main__":
    ntasks = 4
    task = 1
    B, L = 2, 8   # small shapes; hidden dims fixed by the module (768 / 128)

    key = jax.random.PRNGKey(0)
    kx, k1, k2, k3, k4 = jax.random.split(key, 5)

    x = jax.random.normal(kx, (B, L, D_MODEL), dtype=jnp.float32)
    # Stacked per-expert adapter params (deterministic init, Linear-like scale).
    w1 = jax.random.normal(k1, (ntasks, D_MODEL, D_BOTTLENECK), jnp.float32) * 0.02
    b1 = jax.random.normal(k2, (ntasks, 1, D_BOTTLENECK), jnp.float32) * 0.02
    w2 = jax.random.normal(k3, (ntasks, D_BOTTLENECK, D_MODEL), jnp.float32) * 0.02
    b2 = jax.random.normal(k4, (ntasks, 1, D_MODEL), jnp.float32) * 0.02

    out = moe_forward(x, task, w1, b1, w2, b2)
    out = jax.block_until_ready(out)

    ref = reference_forward(x, task, w1, b1, w2, b2)
    assert out.shape == (B, L, D_MODEL)
    assert out.dtype == jnp.bfloat16
    # Tolerance accounts for bf16 matmul operands / bf16 output stream and the
    # tanh-approximate GELU (both matmuls accumulate in f32).
    assert jnp.allclose(out.astype(jnp.float32), ref, rtol=2e-2, atol=2e-2), \
        "mismatch vs reference"

    print("KERNEL_OK")
</pallas_src>

<mosaic_0001>
module attributes {stable_mosaic.version = 11 : i64} {
  func.func @adapter_moe_kernel(%arg0: i32, %arg1: memref<1xi32, #tpu.memory_space<smem>>, %arg2: memref<8x768xf32, #tpu.memory_space<vmem>>, %arg3: memref<1x768x128xf32, #tpu.memory_space<vmem>>, %arg4: memref<1x1x128xf32, #tpu.memory_space<vmem>>, %arg5: memref<1x128x768xf32, #tpu.memory_space<vmem>>, %arg6: memref<1x1x768xf32, #tpu.memory_space<vmem>>, %arg7: memref<8x768xbf16, #tpu.memory_space<vmem>>) attributes {dimension_semantics = [#tpu.dimension_semantics<parallel>], iteration_bounds = array<i64: 2>, scalar_prefetch = 1 : i64, scratch_operands = 0 : i64, tpu.core_type = #tpu.core_type<tc>, window_params = [{transform_indices = @transform_0, window_bounds = array<i64: 8, 768>}, {transform_indices = @transform_1, window_bounds = array<i64: 1, 768, 128>}, {transform_indices = @transform_2, window_bounds = array<i64: 1, 1, 128>}, {transform_indices = @transform_3, window_bounds = array<i64: 1, 128, 768>}, {transform_indices = @transform_4, window_bounds = array<i64: 1, 1, 768>}, {transform_indices = @transform_5, window_bounds = array<i64: 8, 768>}]} {
    %c0 = arith.constant 0 : index
    %c0_0 = arith.constant 0 : index
    %0 = vector.load %arg2[%c0, %c0_0] : memref<8x768xf32, #tpu.memory_space<vmem>>, vector<8x768xf32>
    %1 = arith.truncf %0 : vector<8x768xf32> to vector<8x768xbf16>
    %c0_1 = arith.constant 0 : index
    %c0_2 = arith.constant 0 : index
    %c0_3 = arith.constant 0 : index
    %2 = vector.load %arg3[%c0_1, %c0_2, %c0_3] : memref<1x768x128xf32, #tpu.memory_space<vmem>>, vector<1x768x128xf32>
    %3 = vector.shape_cast %2 : vector<1x768x128xf32> to vector<768x128xf32>
    %4 = arith.truncf %3 : vector<768x128xf32> to vector<768x128xbf16>
    %c0_4 = arith.constant 0 : index
    %c0_5 = arith.constant 0 : index
    %c0_6 = arith.constant 0 : index
    %5 = vector.load %arg4[%c0_4, %c0_5, %c0_6] : memref<1x1x128xf32, #tpu.memory_space<vmem>>, vector<1x1x128xf32>
    %6 = vector.shape_cast %5 : vector<1x1x128xf32> to vector<1x128xf32>
    %cst = arith.constant dense<0.000000e+00> : vector<8x128xf32>
    %7 = tpu.matmul %1, %4, %cst {dimension_numbers = #tpu.dot_dimension_numbers<[1], [0], [0], [1], [0, 0, 1, 1], [], []>} : vector<8x768xbf16>, vector<768x128xbf16>, vector<8x128xf32> -> vector<8x128xf32>
    %8 = vector.broadcast %6 : vector<1x128xf32> to vector<8x128xf32>
    %9 = arith.addf %7, %8 : vector<8x128xf32>
    %cst_7 = arith.constant 5.000000e-01 : f32
    %10 = vector.broadcast %cst_7 : f32 to vector<8x128xf32>
    %11 = arith.mulf %10, %9 : vector<8x128xf32>
    %cst_8 = arith.constant 4.471500e-02 : f32
    %12 = vector.broadcast %cst_8 : f32 to vector<8x128xf32>
    %13 = arith.mulf %12, %9 : vector<8x128xf32>
    %14 = arith.mulf %13, %9 : vector<8x128xf32>
    %15 = arith.mulf %14, %9 : vector<8x128xf32>
    %16 = arith.addf %9, %15 : vector<8x128xf32>
    %cst_9 = arith.constant 0.797884583 : f32
    %17 = vector.broadcast %cst_9 : f32 to vector<8x128xf32>
    %18 = arith.mulf %17, %16 : vector<8x128xf32>
    %19 = math.tanh %18 : vector<8x128xf32>
    %cst_10 = arith.constant 1.000000e+00 : f32
    %20 = vector.broadcast %cst_10 : f32 to vector<8x128xf32>
    %21 = arith.addf %20, %19 : vector<8x128xf32>
    %22 = arith.mulf %11, %21 : vector<8x128xf32>
    %c0_11 = arith.constant 0 : index
    %c0_12 = arith.constant 0 : index
    %c0_13 = arith.constant 0 : index
    %23 = vector.load %arg5[%c0_11, %c0_12, %c0_13] : memref<1x128x768xf32, #tpu.memory_space<vmem>>, vector<1x128x768xf32>
    %24 = vector.shape_cast %23 : vector<1x128x768xf32> to vector<128x768xf32>
    %25 = arith.truncf %24 : vector<128x768xf32> to vector<128x768xbf16>
    %c0_14 = arith.constant 0 : index
    %c0_15 = arith.constant 0 : index
    %c0_16 = arith.constant 0 : index
    %26 = vector.load %arg6[%c0_14, %c0_15, %c0_16] : memref<1x1x768xf32, #tpu.memory_space<vmem>>, vector<1x1x768xf32>
    %27 = vector.shape_cast %26 : vector<1x1x768xf32> to vector<1x768xf32>
    %28 = arith.truncf %22 : vector<8x128xf32> to vector<8x128xbf16>
    %cst_17 = arith.constant dense<0.000000e+00> : vector<8x768xf32>
    %29 = tpu.matmul %28, %25, %cst_17 {dimension_numbers = #tpu.dot_dimension_numbers<[1], [0], [0], [1], [0, 0, 1, 1], [], []>} : vector<8x128xbf16>, vector<128x768xbf16>, vector<8x768xf32> -> vector<8x768xf32>
    %30 = vector.broadcast %27 : vector<1x768xf32> to vector<8x768xf32>
    %31 = arith.addf %29, %30 : vector<8x768xf32>
    %32 = arith.truncf %31 : vector<8x768xf32> to vector<8x768xbf16>
    %cst_18 = arith.constant 5.000000e-01 : bf16
    %33 = vector.broadcast %cst_18 : bf16 to vector<8x768xbf16>
    %34 = arith.mulf %33, %32 : vector<8x768xbf16>
    %cst_19 = arith.constant 4.467770e-02 : bf16
    %35 = vector.broadcast %cst_19 : bf16 to vector<8x768xbf16>
    %36 = arith.mulf %35, %32 : vector<8x768xbf16>
    %37 = arith.mulf %36, %32 : vector<8x768xbf16>
    %38 = arith.mulf %37, %32 : vector<8x768xbf16>
    %39 = arith.addf %32, %38 : vector<8x768xbf16>
    %cst_20 = arith.constant 7.968750e-01 : bf16
    %40 = vector.broadcast %cst_20 : bf16 to vector<8x768xbf16>
    %41 = arith.mulf %40, %39 : vector<8x768xbf16>
    %42 = math.tanh %41 : vector<8x768xbf16>
    %cst_21 = arith.constant 1.000000e+00 : bf16
    %43 = vector.broadcast %cst_21 : bf16 to vector<8x768xbf16>
    %44 = arith.addf %43, %42 : vector<8x768xbf16>
    %45 = arith.mulf %34, %44 : vector<8x768xbf16>
    %46 = arith.addf %1, %45 : vector<8x768xbf16>
    %c0_22 = arith.constant 0 : index
    %c0_23 = arith.constant 0 : index
    %47 = vector.load %arg7[%c0_22, %c0_23] : memref<8x768xbf16, #tpu.memory_space<vmem>>, vector<8x768xbf16>
    tpu.vector_store %arg7[%c0_22, %c0_23], %46 {strides = array<i32>} : memref<8x768xbf16, #tpu.memory_space<vmem>>, vector<8x768xbf16>,
    return
  }
  func.func @transform_0(%arg0: i32, %arg1: memref<1xi32, #tpu.memory_space<smem>>) -> (i32, i32) {
    %c0_i32 = arith.constant 0 : i32
    %c0_i32_0 = arith.constant 0 : i32
    return %arg0, %c0_i32 : i32, i32
  }
  func.func @transform_1(%arg0: i32, %arg1: memref<1xi32, #tpu.memory_space<smem>>) -> (i32, i32, i32) {
    %c0 = arith.constant 0 : index
    %0 = memref.load %arg1[%c0] : memref<1xi32, #tpu.memory_space<smem>>
    %c0_i32 = arith.constant 0 : i32
    %c0_i32_0 = arith.constant 0 : i32
    %c0_i32_1 = arith.constant 0 : i32
    return %0, %c0_i32, %c0_i32_0 : i32, i32, i32
  }
  func.func @transform_2(%arg0: i32, %arg1: memref<1xi32, #tpu.memory_space<smem>>) -> (i32, i32, i32) {
    %c0 = arith.constant 0 : index
    %0 = memref.load %arg1[%c0] : memref<1xi32, #tpu.memory_space<smem>>
    %c0_i32 = arith.constant 0 : i32
    %c0_i32_0 = arith.constant 0 : i32
    %c0_i32_1 = arith.constant 0 : i32
    return %0, %c0_i32, %c0_i32_0 : i32, i32, i32
  }
  func.func @transform_3(%arg0: i32, %arg1: memref<1xi32, #tpu.memory_space<smem>>) -> (i32, i32, i32) {
    %c0 = arith.constant 0 : index
    %0 = memref.load %arg1[%c0] : memref<1xi32, #tpu.memory_space<smem>>
    %c0_i32 = arith.constant 0 : i32
    %c0_i32_0 = arith.constant 0 : i32
    %c0_i32_1 = arith.constant 0 : i32
    return %0, %c0_i32, %c0_i32_0 : i32, i32, i32
  }
  func.func @transform_4(%arg0: i32, %arg1: memref<1xi32, #tpu.memory_space<smem>>) -> (i32, i32, i32) {
    %c0 = arith.constant 0 : index
    %0 = memref.load %arg1[%c0] : memref<1xi32, #tpu.memory_space<smem>>
    %c0_i32 = arith.constant 0 : i32
    %c0_i32_0 = arith.constant 0 : i32
    %c0_i32_1 = arith.constant 0 : i32
    return %0, %c0_i32, %c0_i32_0 : i32, i32, i32
  }
  func.func @transform_5(%arg0: i32, %arg1: memref<1xi32, #tpu.memory_space<smem>>) -> (i32, i32) {
    %c0_i32 = arith.constant 0 : i32
    %c0_i32_0 = arith.constant 0 : i32
    return %arg0, %c0_i32 : i32, i32
  }
}

</mosaic_0001>

<llo_original>
// kernel: _moe_forward_flat.1
$region0: #{_moe_forward_flat.1}
  #allocation0 [shape = 'u32[]', space=smem, size = 0x4, offset = 0x4, fixed_abs, tag = 'smem constant byte address 0x4 - core index']
  #allocation1 [shape = 'u32[144,128]{1,0:T(1,128)}', space=vmem, size = 0x12000, scoped, tag = 'internal scratch']
  #allocation2 [shape = 's32[1]{0}', space=sflag, size = 0x4, scoped, tag = 'scoped memory for _moe_forward_flat.1']
  #allocation3 [shape = 's32[1]{0:T(128)S(6)}', space=smem, size = 0x200, scoped, tag = 'prefetched SMEM operand 0']
  %s0 = inlined_call_operand.<no memory space> [shape: s32[1], index: 0, kind: input, shape index: {}]
  %s1 = inlined_call_operand.hbm [shape: f32[16,768], index: 1, kind: input, shape index: {}]
  %s2 = inlined_call_operand.hbm [shape: f32[4,768,128], index: 2, kind: input, shape index: {}]
  %s3 = inlined_call_operand.hbm [shape: f32[4,1,128], index: 3, kind: input, shape index: {}]
  %s4 = inlined_call_operand.hbm [shape: f32[4,128,768], index: 4, kind: input, shape index: {}]
  %s5 = inlined_call_operand.hbm [shape: f32[4,1,768], index: 5, kind: input, shape index: {}]
  %s6 = inlined_call_operand.hbm [shape: bf16[16,768], index: 6, kind: output, shape index: {}]
  %s7 = sld [smem:[#allocation0]]
  $region73: #{_moe_forward_flat.1} parent=0
    _
  %s9 = ssub.s32 1, %s7
  %s10 = scalar_select 0, %s9, %s7
  %11 = sst [smem:[#allocation3]] %s0
  $region1: #{_moe_forward_flat.1} parent=0
    #allocation4 [shape = 'u8[49152]{0}', space=vmem, size = 0xc000, scoped, tag = 'input window, operand 1']
    #allocation5 [shape = 's32[2]{0}', space=sflag, size = 0x8, scoped, tag = 'scoped memory for _moe_forward_flat.1']
    #allocation6 [shape = 's32[2]{0}', space=sflag, size = 0x8, scoped, tag = 'scoped memory for _moe_forward_flat.1']
    #allocation7 [shape = 'u8[393216]{0}', space=vmem, size = 0x60000, scoped, tag = 'input window, operand 2, single buffered']
    #allocation8 [shape = 's32[1]{0}', space=sflag, size = 0x4, scoped, tag = 'scoped memory for _moe_forward_flat.1']
    #allocation9 [shape = 'u8[512]{0}', space=vmem, size = 0x400, scoped, tag = 'input window, operand 3, single buffered']
    #allocation10 [shape = 'u8[393216]{0}', space=vmem, size = 0x60000, scoped, tag = 'input window, operand 4, single buffered']
    #allocation11 [shape = 's32[1]{0}', space=sflag, size = 0x4, scoped, tag = 'scoped memory for _moe_forward_flat.1']
    #allocation12 [shape = 'u8[3072]{0}', space=vmem, size = 0xc00, scoped, tag = 'input window, operand 5, single buffered']
    #allocation13 [shape = 'u8[24576]{0}', space=vmem, size = 0x6000, scoped, tag = 'output window, operand 0']
    %12 = vsyncpa [#allocation5], 0
    %s13 = scalar_lea.sflag [#allocation5], 1
    %14 = vsyncpa %s13, 0
    %15 = vsyncpa [#allocation8], 0
    %16 = vsyncpa [#allocation11], 0
    %17 = vsyncpa [#allocation6], 0
    %s18 = scalar_lea.sflag [#allocation6], 1
    %19 = vsyncpa %s18, 0
    loop: start=0, step=1, limit=4
    $region2: #{_moe_forward_flat.1} parent=1 // loop_pre_header
      _
    $region3: #{_moe_forward_flat.1} parent=1 // loop_header
      %s21 = sphi 0, %s25
      %p22 = scmp.ge.s32.totalorder %s21, 4
      %s31 = sphi 0, %s33
      %s34 = sphi 0, %s31
      %s35 = sphi 0, %s34
      %s51 = sphi 0, %s35
      %s59 = sphi 0, %s61
      %s62 = sphi 0, %s59
      %s63 = sphi 0, %s62
      %s79 = sphi 0, %s63
      %s87 = sphi 0, %s89
      %s90 = sphi 0, %s87
      %s91 = sphi 0, %s90
      %s107 = sphi 0, %s91
      %s115 = sphi 0, %s117
      %s118 = sphi 0, %s115
      %s119 = sphi 0, %s118
      %s135 = sphi 0, %s119
      %s143 = sphi 0, %s145
      %s146 = sphi 0, %s143
      %s147 = sphi 0, %s146
      %s163 = sphi 0, %s147
      %s169 = sphi 0, %s171
      %s172 = sphi 0, %s169
      %s173 = sphi 0, %s172
      %s189 = sphi 0, %s173
    $region4: #{_moe_forward_flat.1} parent=1 // loop_header_branch
      %24 = sbr.rel (%p22) target = $region8
    $region5: #{_moe_forward_flat.1} parent=1 // loop_body
      %s26 = ssub.s32 %s21, 1
      %s27 = ssub.s32 %s21, 2
      %s28 = sadd.s32 %s21, 1
      %s29 = ssub.s32 %s21, %s28
      %p30 = scmp.eq.s32.totalorder %s29, 0
      %s32 = sadd.s32 %s31, 1
      %s33 = scalar_select %p30, %s31, %s32
      %p36 = pneg %p30
      %p37 = scmp.eq.s32.totalorder %s21, 1
      %p38 = por %p36, %p37
      %p39 = scmp.ne.s32.totalorder %s31, %s34
      %p40 = scmp.eq.s32.totalorder %s21, 0
      %p41 = por %p39, %p40
      %p42 = scmp.ne.s32.totalorder %s31, %s34
      %p43 = scmp.eq.s32.totalorder %s26, 1
      %p44 = por %p42, %p43
      %p45 = scmp.ne.s32.totalorder %s34, %s35
      %p46 = scmp.eq.s32.totalorder %s26, 0
      %p47 = por %p45, %p46
      %p48 = scmp.ne.s32.totalorder %s34, %s35
      %p49 = scmp.eq.s32.totalorder %s27, 1
      %p50 = por %p48, %p49
      %p52 = scmp.ne.s32.totalorder %s35, %s51
      %p53 = scmp.eq.s32.totalorder %s27, 0
      %p54 = por %p52, %p53
      %s55 = sld [smem:[#allocation3]]
      %s56 = sld [smem:[#allocation3]]
      %s57 = ssub.s32 %s55, %s56
      %p58 = scmp.eq.s32.totalorder %s57, 0
      %s60 = sadd.s32 %s59, 1
      %s61 = scalar_select %p58, %s59, %s60
      %p64 = pneg %p58
      %p65 = scmp.eq.s32.totalorder %s21, 1
      %p66 = por %p64, %p65
      %p67 = scmp.ne.s32.totalorder %s59, %s62
      %p68 = scmp.eq.s32.totalorder %s21, 0
      %p69 = por %p67, %p68
      %p70 = scmp.ne.s32.totalorder %s59, %s62
      %p71 = scmp.eq.s32.totalorder %s26, 1
      %p72 = por %p70, %p71
      %p73 = scmp.ne.s32.totalorder %s62, %s63
      %p74 = scmp.eq.s32.totalorder %s26, 0
      %p75 = por %p73, %p74
      %p76 = scmp.ne.s32.totalorder %s62, %s63
      %p77 = scmp.eq.s32.totalorder %s27, 1
      %p78 = por %p76, %p77
      %p80 = scmp.ne.s32.totalorder %s63, %s79
      %p81 = scmp.eq.s32.totalorder %s27, 0
      %p82 = por %p80, %p81
      %s83 = sld [smem:[#allocation3]]
      %s84 = sld [smem:[#allocation3]]
      %s85 = ssub.s32 %s83, %s84
      %p86 = scmp.eq.s32.totalorder %s85, 0
      %s88 = sadd.s32 %s87, 1
      %s89 = scalar_select %p86, %s87, %s88
      %p92 = pneg %p86
      %p93 = scmp.eq.s32.totalorder %s21, 1
      %p94 = por %p92, %p93
      %p95 = scmp.ne.s32.totalorder %s87, %s90
      %p96 = scmp.eq.s32.totalorder %s21, 0
      %p97 = por %p95, %p96
      %p98 = scmp.ne.s32.totalorder %s87, %s90
      %p99 = scmp.eq.s32.totalorder %s26, 1
      %p100 = por %p98, %p99
      %p101 = scmp.ne.s32.totalorder %s90, %s91
      %p102 = scmp.eq.s32.totalorder %s26, 0
      %p103 = por %p101, %p102
      %p104 = scmp.ne.s32.totalorder %s90, %s91
      %p105 = scmp.eq.s32.totalorder %s27, 1
      %p106 = por %p104, %p105
      %p108 = scmp.ne.s32.totalorder %s91, %s107
      %p109 = scmp.eq.s32.totalorder %s27, 0
      %p110 = por %p108, %p109
      %s111 = sld [smem:[#allocation3]]
      %s112 = sld [smem:[#allocation3]]
      %s113 = ssub.s32 %s111, %s112
      %p114 = scmp.eq.s32.totalorder %s113, 0
      %s116 = sadd.s32 %s115, 1
      %s117 = scalar_select %p114, %s115, %s116
      %p120 = pneg %p114
      %p121 = scmp.eq.s32.totalorder %s21, 1
      %p122 = por %p120, %p121
      %p123 = scmp.ne.s32.totalorder %s115, %s118
      %p124 = scmp.eq.s32.totalorder %s21, 0
      %p125 = por %p123, %p124
      %p126 = scmp.ne.s32.totalorder %s115, %s118
      %p127 = scmp.eq.s32.totalorder %s26, 1
      %p128 = por %p126, %p127
      %p129 = scmp.ne.s32.totalorder %s118, %s119
      %p130 = scmp.eq.s32.totalorder %s26, 0
      %p131 = por %p129, %p130
      %p132 = scmp.ne.s32.totalorder %s118, %s119
      %p133 = scmp.eq.s32.totalorder %s27, 1
      %p134 = por %p132, %p133
      %p136 = scmp.ne.s32.totalorder %s119, %s135
      %p137 = scmp.eq.s32.totalorder %s27, 0
      %p138 = por %p136, %p137
      %s139 = sld [smem:[#allocation3]]
      %s140 = sld [smem:[#allocation3]]
      %s141 = ssub.s32 %s139, %s140
      %p142 = scmp.eq.s32.totalorder %s141, 0
      %s144 = sadd.s32 %s143, 1
      %s145 = scalar_select %p142, %s143, %s144
      %p148 = pneg %p142
      %p149 = scmp.eq.s32.totalorder %s21, 1
      %p150 = por %p148, %p149
      %p151 = scmp.ne.s32.totalorder %s143, %s146
      %p152 = scmp.eq.s32.totalorder %s21, 0
      %p153 = por %p151, %p152
      %p154 = scmp.ne.s32.totalorder %s143, %s146
      %p155 = scmp.eq.s32.totalorder %s26, 1
      %p156 = por %p154, %p155
      %p157 = scmp.ne.s32.totalorder %s146, %s147
      %p158 = scmp.eq.s32.totalorder %s26, 0
      %p159 = por %p157, %p158
      %p160 = scmp.ne.s32.totalorder %s146, %s147
      %p161 = scmp.eq.s32.totalorder %s27, 1
      %p162 = por %p160, %p161
      %p164 = scmp.ne.s32.totalorder %s147, %s163
      %p165 = scmp.eq.s32.totalorder %s27, 0
      %p166 = por %p164, %p165
      %s167 = ssub.s32 %s21, %s28
      %p168 = scmp.eq.s32.totalorder %s167, 0
      %s170 = sadd.s32 %s169, 1
      %s171 = scalar_select %p168, %s169, %s170
      %p174 = pneg %p168
      %p175 = scmp.eq.s32.totalorder %s21, 1
      %p176 = por %p174, %p175
      %p177 = scmp.ne.s32.totalorder %s169, %s172
      %p178 = scmp.eq.s32.totalorder %s21, 0
      %p179 = por %p177, %p178
      %p180 = scmp.ne.s32.totalorder %s169, %s172
      %p181 = scmp.eq.s32.totalorder %s26, 1
      %p182 = por %p180, %p181
      %p183 = scmp.ne.s32.totalorder %s172, %s173
      %p184 = scmp.eq.s32.totalorder %s26, 0
      %p185 = por %p183, %p184
      %p186 = scmp.ne.s32.totalorder %s172, %s173
      %p187 = scmp.eq.s32.totalorder %s27, 1
      %p188 = por %p186, %p187
      %p190 = scmp.ne.s32.totalorder %s173, %s189
      %p191 = scmp.eq.s32.totalorder %s27, 0
      %p192 = por %p190, %p191
      %p193 = scmp.le.s32.totalorder 1, %s21
      %p194 = scmp.lt.s32.totalorder %s21, 3
      %p195 = pnand %p193, %p194
      %p196 = pneg %p195
      // Predicated region
      $region9: #{_moe_forward_flat.1} parent=5 // pred_check
        _
      $region10: #{_moe_forward_flat.1} parent=5 // pred_check_branch
        %198 = sbr.rel (%p195) target = $region12
      $region11: #{_moe_forward_flat.1} parent=5 // pred_region
        %s199 = ssub.s32 %s21, 1
        // Predicated region
        $region13: #{_moe_forward_flat.1} parent=11 // pred_check
          %p200 = pneg %p75
        $region14: #{_moe_forward_flat.1} parent=11 // pred_check_branch
          %202 = sbr.rel (%p200) target = $region16
        $region15: #{_moe_forward_flat.1} parent=11 // pred_region
          %s203 = sld [smem:[#allocation3]]
          %s205 = ssub.s32 12288, 12288
          %206 = vsyncadd [#allocation8], %s205
          %s207 = smul.addr %s203, 96
          %s208 = smul.addr %s207, 128
          %s209 = scalar_lea.hbm %s2, %s208
          %s210 = sshll.u32 [#allocation7], 4
          %s211 = int_to_ptr.vmem [resolvable:$true] %s210
          %216 = dma.hbm_to_vmem [thread:$0]  %s209, 12288, %s211, [#allocation8], 128, 128, 8
        $region16: #{_moe_forward_flat.1} parent=11 // pred_fallthru
          _
        // Predicated region
        $region17: #{_moe_forward_flat.1} parent=11 // pred_check
          %p217 = pneg %p103
        $region18: #{_moe_forward_flat.1} parent=11 // pred_check_branch
          %219 = sbr.rel (%p217) target = $region20
        $region19: #{_moe_forward_flat.1} parent=11 // pred_region
          %s220 = sld [smem:[#allocation3]]
          %s222 = ssub.s32 16, 16
          %223 = vsyncadd [#allocation8], %s222
          %s224 = smul.addr %s220, 16
          %s225 = scalar_lea.hbm %s3, %s224
          %s227 = sshll.u32 [#allocation9], 4
          %s228 = int_to_ptr.vmem [resolvable:$true] %s227
          %230 = dma.hbm_to_vmem [thread:$0]  %s225, 16, %s228, [#allocation8]
        $region20: #{_moe_forward_flat.1} parent=11 // pred_fallthru
          _
        // Predicated region
        $region21: #{_moe_forward_flat.1} parent=11 // pred_check
          %p231 = pneg %p131
        $region22: #{_moe_forward_flat.1} parent=11 // pred_check_branch
          %233 = sbr.rel (%p231) target = $region24
        $region23: #{_moe_forward_flat.1} parent=11 // pred_region
          %s234 = sld [smem:[#allocation3]]
          %s236 = ssub.s32 12288, 12288
          %237 = vsyncadd [#allocation11], %s236
          %s238 = smul.addr %s234, 96
          %s239 = smul.addr %s238, 128
          %s240 = scalar_lea.hbm %s4, %s239
          %s241 = sshll.u32 [#allocation10], 4
          %s242 = int_to_ptr.vmem [resolvable:$true] %s241
          %247 = dma.hbm_to_vmem [thread:$0]  %s240, 12288, %s242, [#allocation11], 768, 768, 48
        $region24: #{_moe_forward_flat.1} parent=11 // pred_fallthru
          _
        // Predicated region
        $region25: #{_moe_forward_flat.1} parent=11 // pred_check
          %p248 = pneg %p159
        $region26: #{_moe_forward_flat.1} parent=11 // pred_check_branch
          %250 = sbr.rel (%p248) target = $region28
        $region27: #{_moe_forward_flat.1} parent=11 // pred_region
          %s251 = sld [smem:[#allocation3]]
          %s253 = ssub.s32 96, 96
          %254 = vsyncadd [#allocation11], %s253
          %s255 = smul.addr %s251, 6
          %s256 = smul.addr %s255, 16
          %s257 = scalar_lea.hbm %s5, %s256
          %s259 = sshll.u32 [#allocation12], 4
          %s260 = int_to_ptr.vmem [resolvable:$true] %s259
          %262 = dma.hbm_to_vmem [thread:$0]  %s257, 96, %s260, [#allocation11]
        $region28: #{_moe_forward_flat.1} parent=11 // pred_fallthru
          _
      $region12: #{_moe_forward_flat.1} parent=5 // pred_fallthru
        _
      %p263 = scmp.lt.s32.totalorder %s21, 2
      // Predicated region
      $region29: #{_moe_forward_flat.1} parent=5 // pred_check
        %p264 = pneg %p263
      $region30: #{_moe_forward_flat.1} parent=5 // pred_check_branch
        %266 = sbr.rel (%p264) target = $region32
      $region31: #{_moe_forward_flat.1} parent=5 // pred_region
        // Predicated region
        $region33: #{_moe_forward_flat.1} parent=31 // pred_check
          %p267 = pneg %p41
        $region34: #{_moe_forward_flat.1} parent=31 // pred_check_branch
          %269 = sbr.rel (%p267) target = $region36
        $region35: #{_moe_forward_flat.1} parent=31 // pred_region
          %s270 = sand.u32 %s31, 1
          %s271 = scalar_lea.sflag [#allocation5], %s270
          %s272 = sand.u32 %s31, 1
          %s273 = smul.addr %s272, 48
          %s274 = scalar_lea.vmem [#allocation4], %s273
          %s276 = ssub.s32 768, 768
          %277 = vsyncadd %s271, %s276
          %s278 = smul.addr %s21, 6
          %s279 = smul.addr %s278, 128
          %s280 = scalar_lea.hbm %s1, %s279
          %s282 = sshll.u32 %s274, 4
          %s283 = int_to_ptr.vmem [resolvable:$true] %s282
          %285 = dma.hbm_to_vmem [thread:$0]  %s280, 768, %s283, %s271
        $region36: #{_moe_forward_flat.1} parent=31 // pred_fallthru
          _
      $region32: #{_moe_forward_flat.1} parent=5 // pred_fallthru
        _
      %p286 = scmp.le.s32.totalorder 1, %s21
      %p287 = scmp.lt.s32.totalorder %s21, 3
      %p288 = pnand %p286, %p287
      %p289 = pneg %p288
      // Predicated region
      $region37: #{_moe_forward_flat.1} parent=5 // pred_check
        _
      $region38: #{_moe_forward_flat.1} parent=5 // pred_check_branch
        %291 = sbr.rel (%p288) target = $region40
      $region39: #{_moe_forward_flat.1} parent=5 // pred_region
        %s292 = ssub.s32 %s21, 1
        %s293 = sand.u32 %s34, 1
        %s294 = scalar_lea.sflag [#allocation5], %s293
        %s295 = sand.u32 %s34, 1
        %s296 = smul.addr %s295, 48
        %s297 = scalar_lea.vmem [#allocation4], %s296
        // Predicated region
        $region41: #{_moe_forward_flat.1} parent=39 // pred_check
          %p298 = pneg %p47
        $region42: #{_moe_forward_flat.1} parent=39 // pred_check_branch
          %300 = sbr.rel (%p298) target = $region44
        $region43: #{_moe_forward_flat.1} parent=39 // pred_region
          %301 = dma.done %s294, 768
        $region44: #{_moe_forward_flat.1} parent=39 // pred_fallthru
          _
        // Predicated region
        $region45: #{_moe_forward_flat.1} parent=39 // pred_check
          %p302 = pneg %p75
        $region46: #{_moe_forward_flat.1} parent=39 // pred_check_branch
          %304 = sbr.rel (%p302) target = $region48
        $region47: #{_moe_forward_flat.1} parent=39 // pred_region
          %305 = dma.done [#allocation8], 12288
        $region48: #{_moe_forward_flat.1} parent=39 // pred_fallthru
          _
        // Predicated region
        $region49: #{_moe_forward_flat.1} parent=39 // pred_check
          %p306 = pneg %p103
        $region50: #{_moe_forward_flat.1} parent=39 // pred_check_branch
          %308 = sbr.rel (%p306) target = $region52
        $region51: #{_moe_forward_flat.1} parent=39 // pred_region
          %309 = dma.done [#allocation8], 16
        $region52: #{_moe_forward_flat.1} parent=39 // pred_fallthru
          _
        // Predicated region
        $region53: #{_moe_forward_flat.1} parent=39 // pred_check
          %p310 = pneg %p131
        $region54: #{_moe_forward_flat.1} parent=39 // pred_check_branch
          %312 = sbr.rel (%p310) target = $region56
        $region55: #{_moe_forward_flat.1} parent=39 // pred_region
          %313 = dma.done [#allocation11], 12288
        $region56: #{_moe_forward_flat.1} parent=39 // pred_fallthru
          _
        // Predicated region
        $region57: #{_moe_forward_flat.1} parent=39 // pred_check
          %p314 = pneg %p159
        $region58: #{_moe_forward_flat.1} parent=39 // pred_check_branch
          %316 = sbr.rel (%p314) target = $region60
        $region59: #{_moe_forward_flat.1} parent=39 // pred_region
          %317 = dma.done [#allocation11], 96
        $region60: #{_moe_forward_flat.1} parent=39 // pred_fallthru
          _
        %s318 = sand.u32 %s34, 1
        %s319 = scalar_lea.sflag [#allocation5], %s318
        %s320 = sand.u32 %s34, 1
        %s321 = smul.addr %s320, 48
        %s322 = scalar_lea.vmem [#allocation4], %s321
        %p323 = pneg %p47
        %p324 = pneg %p44
        %p325 = pneg %p75
        %p326 = pneg %p72
        %p327 = pneg %p103
        %p328 = pneg %p100
        %p329 = pneg %p131
        %p330 = pneg %p128
        %p331 = pneg %p159
        %p332 = pneg %p156
        %p333 = pneg %p185
        %p334 = pneg %p182
        %s335 = sand.u32 %s172, 1
        %s336 = scalar_lea.sflag [#allocation6], %s335
        %s337 = sand.u32 %s172, 1
        %s338 = smul.addr %s337, 24
        %s339 = scalar_lea.vmem [#allocation13], %s338
        %s340 = sld [smem:[#allocation3]]
        %s341 = sld [smem:[#allocation3]]
        %s342 = sld [smem:[#allocation3]]
        %s343 = sld [smem:[#allocation3]]
        %v349 = vld [vmem:[%s297] sm:$0xff]
        %v350 = vld [vmem:[%s297 + $0x8] sm:$0xff]
        %v351 = vld [vmem:[%s297 + $0x10] sm:$0xff]
        %v352 = vld [vmem:[%s297 + $0x18] sm:$0xff]
        %v353 = vld [vmem:[%s297 + $0x20] sm:$0xff]
        %v354 = vld [vmem:[%s297 + $0x28] sm:$0xff]
        %v355 = vpack.c.bf16 %v349, %v349
        %v356 = vpack.c.bf16 %v350, %v350
        %v357 = vpack.c.bf16 %v351, %v351
        %v358 = vpack.c.bf16 %v352, %v352
        %v359 = vpack.c.bf16 %v353, %v353
        %v360 = vpack.c.bf16 %v354, %v354
        %v361 = vld [vmem:[#allocation7] sm:$0xff]
        %v362 = vld [vmem:[#allocation7 + $0x8] sm:$0xff]
        %v363 = vld [vmem:[#allocation7 + $0x10] sm:$0xff]
        %v364 = vld [vmem:[#allocation7 + $0x18] sm:$0xff]
        %v365 = vld [vmem:[#allocation7 + $0x20] sm:$0xff]
        %v366 = vld [vmem:[#allocation7 + $0x28] sm:$0xff]
        %v367 = vld [vmem:[#allocation7 + $0x30] sm:$0xff]
        %v368 = vld [vmem:[#allocation7 + $0x38] sm:$0xff]
        %v369 = vld [vmem:[#allocation7 + $0x40] sm:$0xff]
        %v370 = vld [vmem:[#allocation7 + $0x48] sm:$0xff]
        %v371 = vld [vmem:[#allocation7 + $0x50] sm:$0xff]
        %v372 = vld [vmem:[#allocation7 + $0x58] sm:$0xff]
        %v373 = vld [vmem:[#allocation7 + $0x60] sm:$0xff]
        %v374 = vld [vmem:[#allocation7 + $0x68] sm:$0xff]
        %v375 = vld [vmem:[#allocation7 + $0x70] sm:$0xff]
        %v376 = vld [vmem:[#allocation7 + $0x78] sm:$0xff]
        %v377 = vld [vmem:[#allocation7 + $0x80] sm:$0xff]
        %v378 = vld [vmem:[#allocation7 + $0x88] sm:$0xff]
        %v379 = vld [vmem:[#allocation7 + $0x90] sm:$0xff]
        %v380 = vld [vmem:[#allocation7 + $0x98] sm:$0xff]
        %v381 = vld [vmem:[#allocation7 + $0xa0] sm:$0xff]
        %v382 = vld [vmem:[#allocation7 + $0xa8] sm:$0xff]
        %v383 = vld [vmem:[#allocation7 + $0xb0] sm:$0xff]
        %v384 = vld [vmem:[#allocation7 + $0xb8] sm:$0xff]
        %v385 = vld [vmem:[#allocation7 + $0xc0] sm:$0xff]
        %v386 = vld [vmem:[#allocation7 + $0xc8] sm:$0xff]
        %v387 = vld [vmem:[#allocation7 + $0xd0] sm:$0xff]
        %v388 = vld [vmem:[#allocation7 + $0xd8] sm:$0xff]
        %v389 = vld [vmem:[#allocation7 + $0xe0] sm:$0xff]
        %v390 = vld [vmem:[#allocation7 + $0xe8] sm:$0xff]
        %v391 = vld [vmem:[#allocation7 + $0xf0] sm:$0xff]
        %v392 = vld [vmem:[#allocation7 + $0xf8] sm:$0xff]
        %v393 = vld [vmem:[#allocation7 + $0x100] sm:$0xff]
        %v394 = vld [vmem:[#allocation7 + $0x108] sm:$0xff]
        %v395 = vld [vmem:[#allocation7 + $0x110] sm:$0xff]
        %v396 = vld [vmem:[#allocation7 + $0x118] sm:$0xff]
        %v397 = vld [vmem:[#allocation7 + $0x120] sm:$0xff]
        %v398 = vld [vmem:[#allocation7 + $0x128] sm:$0xff]
        %v399 = vld [vmem:[#allocation7 + $0x130] sm:$0xff]
        %v400 = vld [vmem:[#allocation7 + $0x138] sm:$0xff]
        %v401 = vld [vmem:[#allocation7 + $0x140] sm:$0xff]
        %v402 = vld [vmem:[#allocation7 + $0x148] sm:$0xff]
        %v403 = vld [vmem:[#allocation7 + $0x150] sm:$0xff]
        %v404 = vld [vmem:[#allocation7 + $0x158] sm:$0xff]
        %v405 = vld [vmem:[#allocation7 + $0x160] sm:$0xff]
        %v406 = vld [vmem:[#allocation7 + $0x168] sm:$0xff]
        %v407 = vld [vmem:[#allocation7 + $0x170] sm:$0xff]
        %v408 = vld [vmem:[#allocation7 + $0x178] sm:$0xff]
        %v409 = vld [vmem:[#allocation7 + $0x180] sm:$0xff]
        %v410 = vld [vmem:[#allocation7 + $0x188] sm:$0xff]
        %v411 = vld [vmem:[#allocation7 + $0x190] sm:$0xff]
        %v412 = vld [vmem:[#allocation7 + $0x198] sm:$0xff]
        %v413 = vld [vmem:[#allocation7 + $0x1a0] sm:$0xff]
        %v414 = vld [vmem:[#allocation7 + $0x1a8] sm:$0xff]
        %v415 = vld [vmem:[#allocation7 + $0x1b0] sm:$0xff]
        %v416 = vld [vmem:[#allocation7 + $0x1b8] sm:$0xff]
        %v417 = vld [vmem:[#allocation7 + $0x1c0] sm:$0xff]
        %v418 = vld [vmem:[#allocation7 + $0x1c8] sm:$0xff]
        %v419 = vld [vmem:[#allocation7 + $0x1d0] sm:$0xff]
        %v420 = vld [vmem:[#allocation7 + $0x1d8] sm:$0xff]
        %v421 = vld [vmem:[#allocation7 + $0x1e0] sm:$0xff]
        %v422 = vld [vmem:[#allocation7 + $0x1e8] sm:$0xff]
        %v423 = vld [vmem:[#allocation7 + $0x1f0] sm:$0xff]
        %v424 = vld [vmem:[#allocation7 + $0x1f8] sm:$0xff]
        %v425 = vld [vmem:[#allocation7 + $0x200] sm:$0xff]
        %v426 = vld [vmem:[#allocation7 + $0x208] sm:$0xff]
        %v427 = vld [vmem:[#allocation7 + $0x210] sm:$0xff]
        %v428 = vld [vmem:[#allocation7 + $0x218] sm:$0xff]
        %v429 = vld [vmem:[#allocation7 + $0x220] sm:$0xff]
        %v430 = vld [vmem:[#allocation7 + $0x228] sm:$0xff]
        %v431 = vld [vmem:[#allocation7 + $0x230] sm:$0xff]
        %v432 = vld [vmem:[#allocation7 + $0x238] sm:$0xff]
        %v433 = vld [vmem:[#allocation7 + $0x240] sm:$0xff]
        %v434 = vld [vmem:[#allocation7 + $0x248] sm:$0xff]
        %v435 = vld [vmem:[#allocation7 + $0x250] sm:$0xff]
        %v436 = vld [vmem:[#allocation7 + $0x258] sm:$0xff]
        %v437 = vld [vmem:[#allocation7 + $0x260] sm:$0xff]
        %v438 = vld [vmem:[#allocation7 + $0x268] sm:$0xff]
        %v439 = vld [vmem:[#allocation7 + $0x270] sm:$0xff]
        %v440 = vld [vmem:[#allocation7 + $0x278] sm:$0xff]
        %v441 = vld [vmem:[#allocation7 + $0x280] sm:$0xff]
        %v442 = vld [vmem:[#allocation7 + $0x288] sm:$0xff]
        %v443 = vld [vmem:[#allocation7 + $0x290] sm:$0xff]
        %v444 = vld [vmem:[#allocation7 + $0x298] sm:$0xff]
        %v445 = vld [vmem:[#allocation7 + $0x2a0] sm:$0xff]
        %v446 = vld [vmem:[#allocation7 + $0x2a8] sm:$0xff]
        %v447 = vld [vmem:[#allocation7 + $0x2b0] sm:$0xff]
        %v448 = vld [vmem:[#allocation7 + $0x2b8] sm:$0xff]
        %v449 = vld [vmem:[#allocation7 + $0x2c0] sm:$0xff]
        %v450 = vld [vmem:[#allocation7 + $0x2c8] sm:$0xff]
        %v451 = vld [vmem:[#allocation7 + $0x2d0] sm:$0xff]
        %v452 = vld [vmem:[#allocation7 + $0x2d8] sm:$0xff]
        %v453 = vld [vmem:[#allocation7 + $0x2e0] sm:$0xff]
        %v454 = vld [vmem:[#allocation7 + $0x2e8] sm:$0xff]
        %v455 = vld [vmem:[#allocation7 + $0x2f0] sm:$0xff]
        %v456 = vld [vmem:[#allocation7 + $0x2f8] sm:$0xff]
        %v457 = vpack.c.bf16 %v362, %v361
        %v458 = vpack.c.bf16 %v364, %v363
        %v459 = vpack.c.bf16 %v366, %v365
        %v460 = vpack.c.bf16 %v368, %v367
        %v461 = vpack.c.bf16 %v370, %v369
        %v462 = vpack.c.bf16 %v372, %v371
        %v463 = vpack.c.bf16 %v374, %v373
        %v464 = vpack.c.bf16 %v376, %v375
        %v465 = vpack.c.bf16 %v378, %v377
        %v466 = vpack.c.bf16 %v380, %v379
        %v467 = vpack.c.bf16 %v382, %v381
        %v468 = vpack.c.bf16 %v384, %v383
        %v469 = vpack.c.bf16 %v386, %v385
        %v470 = vpack.c.bf16 %v388, %v387
        %v471 = vpack.c.bf16 %v390, %v389
        %v472 = vpack.c.bf16 %v392, %v391
        %v473 = vpack.c.bf16 %v394, %v393
        %v474 = vpack.c.bf16 %v396, %v395
        %v475 = vpack.c.bf16 %v398, %v397
        %v476 = vpack.c.bf16 %v400, %v399
        %v477 = vpack.c.bf16 %v402, %v401
        %v478 = vpack.c.bf16 %v404, %v403
        %v479 = vpack.c.bf16 %v406, %v405
        %v480 = vpack.c.bf16 %v408, %v407
        %v481 = vpack.c.bf16 %v410, %v409
        %v482 = vpack.c.bf16 %v412, %v411
        %v483 = vpack.c.bf16 %v414, %v413
        %v484 = vpack.c.bf16 %v416, %v415
        %v485 = vpack.c.bf16 %v418, %v417
        %v486 = vpack.c.bf16 %v420, %v419
        %v487 = vpack.c.bf16 %v422, %v421
        %v488 = vpack.c.bf16 %v424, %v423
        %v489 = vpack.c.bf16 %v426, %v425
        %v490 = vpack.c.bf16 %v428, %v427
        %v491 = vpack.c.bf16 %v430, %v429
        %v492 = vpack.c.bf16 %v432, %v431
        %v493 = vpack.c.bf16 %v434, %v433
        %v494 = vpack.c.bf16 %v436, %v435
        %v495 = vpack.c.bf16 %v438, %v437
        %v496 = vpack.c.bf16 %v440, %v439
        %v497 = vpack.c.bf16 %v442, %v441
        %v498 = vpack.c.bf16 %v444, %v443
        %v499 = vpack.c.bf16 %v446, %v445
        %v500 = vpack.c.bf16 %v448, %v447
        %v501 = vpack.c.bf16 %v450, %v449
        %v502 = vpack.c.bf16 %v452, %v451
        %v503 = vpack.c.bf16 %v454, %v453
        %v504 = vpack.c.bf16 %v456, %v455
        %v505 = vld [vmem:[#allocation9] sm:$0x1]
        %v507 = vlaneseq
        %v508 = vshrl.u32 %v507, 7
        %v509 = vsub.s32 0, %v508
        %v510 = vrot.slane %v505, %v509
        %512 = vmatprep.subr.bf16.mxu0 0
        %513 = vmatpush1.bf16.msra.mxu0 %v457
        %514 = vmatprep.subr.bf16.mxu0 0
        %515 = vmatpush1.bf16.msra.mxu0 %v458
        %516 = vmatprep.subr.bf16.mxu0 0
        %517 = vmatpush1.bf16.msra.mxu0 %v459
        %518 = vmatprep.subr.bf16.mxu0 0
        %519 = vmatpush1.bf16.msra.mxu0 %v460
        %520 = vmatprep.subr.bf16.mxu0 0
        %521 = vmatpush1.bf16.msra.mxu0 %v461
        %522 = vmatprep.subr.bf16.mxu0 0
        %523 = vmatpush1.bf16.msra.mxu0 %v462
        %524 = vmatprep.subr.bf16.mxu0 0
        %525 = vmatpush1.bf16.msra.mxu0 %v463
        %526 = vmatprep.subr.bf16.mxu0 0
        %527 = vmatpush1.bf16.msra.mxu0 %v464
        %528 = vmatprep.subr.bf16.mxu0 0
        %529 = vmatpush1.bf16.msra.mxu0 %v465
        %530 = vmatprep.subr.bf16.mxu0 0
        %531 = vmatpush1.bf16.msra.mxu0 %v466
        %532 = vmatprep.subr.bf16.mxu0 0
        %533 = vmatpush1.bf16.msra.mxu0 %v467
        %534 = vmatprep.subr.bf16.mxu0 0
        %535 = vmatpush1.bf16.msra.mxu0 %v468
        %536 = vmatprep.subr.bf16.mxu0 0
        %537 = vmatpush1.bf16.msra.mxu0 %v469
        %538 = vmatprep.subr.bf16.mxu0 0
        %539 = vmatpush1.bf16.msra.mxu0 %v470
        %540 = vmatprep.subr.bf16.mxu0 0
        %541 = vmatpush1.bf16.msra.mxu0 %v471
        %542 = vmatprep.subr.bf16.mxu0 0
        %543 = vmatpush1.bf16.msra.mxu0 %v472
        %544 = vmatprep.mubr.bf16.mxu0 %v356
        %545 = vmatmul.mubr.bf16.gmra.mrb[0].mxu0 %v355
        %v546 = vpop.f32.mrb[0].mxu0
        %v547 = vadd.f32 %v510, %v546
        %v548 = vpop.f32.mrb[0].mxu0
        %v549 = vpop.f32.mrb[0].mxu0
        %v550 = vpop.f32.mrb[0].mxu0
        %551 = vdwg.mxu0
        %552 = vmatprep.subr.bf16.mxu0 0
        %553 = vmatpush1.bf16.msra.mxu0 %v473
        %554 = vmatprep.subr.bf16.mxu0 0
        %555 = vmatpush1.bf16.msra.mxu0 %v474
        %556 = vmatprep.subr.bf16.mxu0 0
        %557 = vmatpush1.bf16.msra.mxu0 %v475
        %558 = vmatprep.subr.bf16.mxu0 0
        %559 = vmatpush1.bf16.msra.mxu0 %v476
        %560 = vmatprep.subr.bf16.mxu0 0
        %561 = vmatpush1.bf16.msra.mxu0 %v477
        %562 = vmatprep.subr.bf16.mxu0 0
        %563 = vmatpush1.bf16.msra.mxu0 %v478
        %564 = vmatprep.subr.bf16.mxu0 0
        %565 = vmatpush1.bf16.msra.mxu0 %v479
        %566 = vmatprep.subr.bf16.mxu0 0
        %567 = vmatpush1.bf16.msra.mxu0 %v480
        %568 = vmatprep.subr.bf16.mxu0 0
        %569 = vmatpush1.bf16.msra.mxu0 %v481
        %570 = vmatprep.subr.bf16.mxu0 0
        %571 = vmatpush1.bf16.msra.mxu0 %v482
        %572 = vmatprep.subr.bf16.mxu0 0
        %573 = vmatpush1.bf16.msra.mxu0 %v483
        %574 = vmatprep.subr.bf16.mxu0 0
        %575 = vmatpush1.bf16.msra.mxu0 %v484
        %576 = vmatprep.subr.bf16.mxu0 0
        %577 = vmatpush1.bf16.msra.mxu0 %v485
        %578 = vmatprep.subr.bf16.mxu0 0
        %579 = vmatpush1.bf16.msra.mxu0 %v486
        %580 = vmatprep.subr.bf16.mxu0 0
        %581 = vmatpush1.bf16.msra.mxu0 %v487
        %582 = vmatprep.subr.bf16.mxu0 0
        %583 = vmatpush1.bf16.msra.mxu0 %v488
        %584 = vmatprep.mubr.bf16.mxu0 %v358
        %585 = vmatmul.mubr.bf16.gmra.mrb[0].mxu0 %v357
        %v586 = vpop.f32.mrb[0].mxu0
        %v587 = vadd.f32 %v547, %v586
        %v588 = vpop.f32.mrb[0].mxu0
        %v589 = vpop.f32.mrb[0].mxu0
        %v590 = vpop.f32.mrb[0].mxu0
        %591 = vdwg.mxu0
        %592 = vmatprep.subr.bf16.mxu0 0
        %593 = vmatpush1.bf16.msra.mxu0 %v489
        %594 = vmatprep.subr.bf16.mxu0 0
        %595 = vmatpush1.bf16.msra.mxu0 %v490
        %596 = vmatprep.subr.bf16.mxu0 0
        %597 = vmatpush1.bf16.msra.mxu0 %v491
        %598 = vmatprep.subr.bf16.mxu0 0
        %599 = vmatpush1.bf16.msra.mxu0 %v492
        %600 = vmatprep.subr.bf16.mxu0 0
        %601 = vmatpush1.bf16.msra.mxu0 %v493
        %602 = vmatprep.subr.bf16.mxu0 0
        %603 = vmatpush1.bf16.msra.mxu0 %v494
        %604 = vmatprep.subr.bf16.mxu0 0
        %605 = vmatpush1.bf16.msra.mxu0 %v495
        %606 = vmatprep.subr.bf16.mxu0 0
        %607 = vmatpush1.bf16.msra.mxu0 %v496
        %608 = vmatprep.subr.bf16.mxu0 0
        %609 = vmatpush1.bf16.msra.mxu0 %v497
        %610 = vmatprep.subr.bf16.mxu0 0
        %611 = vmatpush1.bf16.msra.mxu0 %v498
        %612 = vmatprep.subr.bf16.mxu0 0
        %613 = vmatpush1.bf16.msra.mxu0 %v499
        %614 = vmatprep.subr.bf16.mxu0 0
        %615 = vmatpush1.bf16.msra.mxu0 %v500
        %616 = vmatprep.subr.bf16.mxu0 0
        %617 = vmatpush1.bf16.msra.mxu0 %v501
        %618 = vmatprep.subr.bf16.mxu0 0
        %619 = vmatpush1.bf16.msra.mxu0 %v502
        %620 = vmatprep.subr.bf16.mxu0 0
        %621 = vmatpush1.bf16.msra.mxu0 %v503
        %622 = vmatprep.subr.bf16.mxu0 0
        %623 = vmatpush1.bf16.msra.mxu0 %v504
        %624 = vmatprep.mubr.bf16.mxu0 %v360
        %625 = vmatmul.mubr.bf16.gmra.mrb[0].mxu0 %v359
        %v626 = vpop.f32.mrb[0].mxu0
        %v627 = vadd.f32 %v587, %v626
        %v628 = vpop.f32.mrb[0].mxu0
        %v629 = vpop.f32.mrb[0].mxu0
        %v630 = vpop.f32.mrb[0].mxu0
        %631 = vdwg.mxu0
        %v632 = vmul.f32 %v627, 0.5
        %v633 = vmul.f32 %v627, 0.044715
        %v634 = vmul.f32 %v633, %v627
        %v635 = vmul.f32 %v634, %v627
        %v636 = vadd.f32 %v627, %v635
        %v637 = vmul.f32 %v636, 0.7978846
        %v638 = vtanh.pop %v637
        %v639 = vadd.f32 %v638, 1.0
        %v640 = vmul.f32 %v632, %v639
        %v641 = vld [vmem:[#allocation10] sm:$0xff]
        %v642 = vld [vmem:[#allocation10 + $0x8] sm:$0xff]
        %v643 = vld [vmem:[#allocation10 + $0x10] sm:$0xff]
        %v644 = vld [vmem:[#allocation10 + $0x18] sm:$0xff]
        %v645 = vld [vmem:[#allocation10 + $0x20] sm:$0xff]
        %v646 = vld [vmem:[#allocation10 + $0x28] sm:$0xff]
        %v647 = vld [vmem:[#allocation10 + $0x30] sm:$0xff]
        %v648 = vld [vmem:[#allocation10 + $0x38] sm:$0xff]
        %v649 = vld [vmem:[#allocation10 + $0x40] sm:$0xff]
        %v650 = vld [vmem:[#allocation10 + $0x48] sm:$0xff]
        %v651 = vld [vmem:[#allocation10 + $0x50] sm:$0xff]
        %v652 = vld [vmem:[#allocation10 + $0x58] sm:$0xff]
        %v653 = vld [vmem:[#allocation10 + $0x60] sm:$0xff]
        %v654 = vld [vmem:[#allocation10 + $0x68] sm:$0xff]
        %v655 = vld [vmem:[#allocation10 + $0x70] sm:$0xff]
        %v656 = vld [vmem:[#allocation10 + $0x78] sm:$0xff]
        %v657 = vld [vmem:[#allocation10 + $0x80] sm:$0xff]
        %v658 = vld [vmem:[#allocation10 + $0x88] sm:$0xff]
        %v659 = vld [vmem:[#allocation10 + $0x90] sm:$0xff]
        %v660 = vld [vmem:[#allocation10 + $0x98] sm:$0xff]
        %v661 = vld [vmem:[#allocation10 + $0xa0] sm:$0xff]
        %v662 = vld [vmem:[#allocation10 + $0xa8] sm:$0xff]
        %v663 = vld [vmem:[#allocation10 + $0xb0] sm:$0xff]
        %v664 = vld [vmem:[#allocation10 + $0xb8] sm:$0xff]
        %v665 = vld [vmem:[#allocation10 + $0xc0] sm:$0xff]
        %v666 = vld [vmem:[#allocation10 + $0xc8] sm:$0xff]
        %v667 = vld [vmem:[#allocation10 + $0xd0] sm:$0xff]
        %v668 = vld [vmem:[#allocation10 + $0xd8] sm:$0xff]
        %v669 = vld [vmem:[#allocation10 + $0xe0] sm:$0xff]
        %v670 = vld [vmem:[#allocation10 + $0xe8] sm:$0xff]
        %v671 = vld [vmem:[#allocation10 + $0xf0] sm:$0xff]
        %v672 = vld [vmem:[#allocation10 + $0xf8] sm:$0xff]
        %v673 = vld [vmem:[#allocation10 + $0x100] sm:$0xff]
        %v674 = vld [vmem:[#allocation10 + $0x108] sm:$0xff]
        %v675 = vld [vmem:[#allocation10 + $0x110] sm:$0xff]
        %v676 = vld [vmem:[#allocation10 + $0x118] sm:$0xff]
        %v677 = vld [vmem:[#allocation10 + $0x120] sm:$0xff]
        %v678 = vld [vmem:[#allocation10 + $0x128] sm:$0xff]
        %v679 = vld [vmem:[#allocation10 + $0x130] sm:$0xff]
        %v680 = vld [vmem:[#allocation10 + $0x138] sm:$0xff]
        %v681 = vld [vmem:[#allocation10 + $0x140] sm:$0xff]
        %v682 = vld [vmem:[#allocation10 + $0x148] sm:$0xff]
        %v683 = vld [vmem:[#allocation10 + $0x150] sm:$0xff]
        %v684 = vld [vmem:[#allocation10 + $0x158] sm:$0xff]
        %v685 = vld [vmem:[#allocation10 + $0x160] sm:$0xff]
        %v686 = vld [vmem:[#allocation10 + $0x168] sm:$0xff]
        %v687 = vld [vmem:[#allocation10 + $0x170] sm:$0xff]
        %v688 = vld [vmem:[#allocation10 + $0x178] sm:$0xff]
        %v689 = vld [vmem:[#allocation10 + $0x180] sm:$0xff]
        %v690 = vld [vmem:[#allocation10 + $0x188] sm:$0xff]
        %v691 = vld [vmem:[#allocation10 + $0x190] sm:$0xff]
        %v692 = vld [vmem:[#allocation10 + $0x198] sm:$0xff]
        %v693 = vld [vmem:[#allocation10 + $0x1a0] sm:$0xff]
        %v694 = vld [vmem:[#allocation10 + $0x1a8] sm:$0xff]
        %v695 = vld [vmem:[#allocation10 + $0x1b0] sm:$0xff]
        %v696 = vld [vmem:[#allocation10 + $0x1b8] sm:$0xff]
        %v697 = vld [vmem:[#allocation10 + $0x1c0] sm:$0xff]
        %v698 = vld [vmem:[#allocation10 + $0x1c8] sm:$0xff]
        %v699 = vld [vmem:[#allocation10 + $0x1d0] sm:$0xff]
        %v700 = vld [vmem:[#allocation10 + $0x1d8] sm:$0xff]
        %v701 = vld [vmem:[#allocation10 + $0x1e0] sm:$0xff]
        %v702 = vld [vmem:[#allocation10 + $0x1e8] sm:$0xff]
        %v703 = vld [vmem:[#allocation10 + $0x1f0] sm:$0xff]
        %v704 = vld [vmem:[#allocation10 + $0x1f8] sm:$0xff]
        %v705 = vld [vmem:[#allocation10 + $0x200] sm:$0xff]
        %v706 = vld [vmem:[#allocation10 + $0x208] sm:$0xff]
        %v707 = vld [vmem:[#allocation10 + $0x210] sm:$0xff]
        %v708 = vld [vmem:[#allocation10 + $0x218] sm:$0xff]
        %v709 = vld [vmem:[#allocation10 + $0x220] sm:$0xff]
        %v710 = vld [vmem:[#allocation10 + $0x228] sm:$0xff]
        %v711 = vld [vmem:[#allocation10 + $0x230] sm:$0xff]
        %v712 = vld [vmem:[#allocation10 + $0x238] sm:$0xff]
        %v713 = vld [vmem:[#allocation10 + $0x240] sm:$0xff]
        %v714 = vld [vmem:[#allocation10 + $0x248] sm:$0xff]
        %v715 = vld [vmem:[#allocation10 + $0x250] sm:$0xff]
        %v716 = vld [vmem:[#allocation10 + $0x258] sm:$0xff]
        %v717 = vld [vmem:[#allocation10 + $0x260] sm:$0xff]
        %v718 = vld [vmem:[#allocation10 + $0x268] sm:$0xff]
        %v719 = vld [vmem:[#allocation10 + $0x270] sm:$0xff]
        %v720 = vld [vmem:[#allocation10 + $0x278] sm:$0xff]
        %v721 = vld [vmem:[#allocation10 + $0x280] sm:$0xff]
        %v722 = vld [vmem:[#allocation10 + $0x288] sm:$0xff]
        %v723 = vld [vmem:[#allocation10 + $0x290] sm:$0xff]
        %v724 = vld [vmem:[#allocation10 + $0x298] sm:$0xff]
        %v725 = vld [vmem:[#allocation10 + $0x2a0] sm:$0xff]
        %v726 = vld [vmem:[#allocation10 + $0x2a8] sm:$0xff]
        %v727 = vld [vmem:[#allocation10 + $0x2b0] sm:$0xff]
        %v728 = vld [vmem:[#allocation10 + $0x2b8] sm:$0xff]
        %v729 = vld [vmem:[#allocation10 + $0x2c0] sm:$0xff]
        %v730 = vld [vmem:[#allocation10 + $0x2c8] sm:$0xff]
        %v731 = vld [vmem:[#allocation10 + $0x2d0] sm:$0xff]
        %v732 = vld [vmem:[#allocation10 + $0x2d8] sm:$0xff]
        %v733 = vld [vmem:[#allocation10 + $0x2e0] sm:$0xff]
        %v734 = vld [vmem:[#allocation10 + $0x2e8] sm:$0xff]
        %v735 = vld [vmem:[#allocation10 + $0x2f0] sm:$0xff]
        %v736 = vld [vmem:[#allocation10 + $0x2f8] sm:$0xff]
        %v737 = vpack.c.bf16 %v647, %v641
        %v738 = vpack.c.bf16 %v648, %v642
        %v739 = vpack.c.bf16 %v649, %v643
        %v740 = vpack.c.bf16 %v650, %v644
        %v741 = vpack.c.bf16 %v651, %v645
        %v742 = vpack.c.bf16 %v652, %v646
        %v743 = vpack.c.bf16 %v659, %v653
        %v744 = vpack.c.bf16 %v660, %v654
        %v745 = vpack.c.bf16 %v661, %v655
        %v746 = vpack.c.bf16 %v662, %v656
        %v747 = vpack.c.bf16 %v663, %v657
        %v748 = vpack.c.bf16 %v664, %v658
        %v749 = vpack.c.bf16 %v671, %v665
        %v750 = vpack.c.bf16 %v672, %v666
        %v751 = vpack.c.bf16 %v673, %v667
        %v752 = vpack.c.bf16 %v674, %v668
        %v753 = vpack.c.bf16 %v675, %v669
        %v754 = vpack.c.bf16 %v676, %v670
        %v755 = vpack.c.bf16 %v683, %v677
        %v756 = vpack.c.bf16 %v684, %v678
        %v757 = vpack.c.bf16 %v685, %v679
        %v758 = vpack.c.bf16 %v686, %v680
        %v759 = vpack.c.bf16 %v687, %v681
        %v760 = vpack.c.bf16 %v688, %v682
        %v761 = vpack.c.bf16 %v695, %v689
        %v762 = vpack.c.bf16 %v696, %v690
        %v763 = vpack.c.bf16 %v697, %v691
        %v764 = vpack.c.bf16 %v698, %v692
        %v765 = vpack.c.bf16 %v699, %v693
        %v766 = vpack.c.bf16 %v700, %v694
        %v767 = vpack.c.bf16 %v707, %v701
        %v768 = vpack.c.bf16 %v708, %v702
        %v769 = vpack.c.bf16 %v709, %v703
        %v770 = vpack.c.bf16 %v710, %v704
        %v771 = vpack.c.bf16 %v711, %v705
        %v772 = vpack.c.bf16 %v712, %v706
        %v773 = vpack.c.bf16 %v719, %v713
        %v774 = vpack.c.bf16 %v720, %v714
        %v775 = vpack.c.bf16 %v721, %v715
        %v776 = vpack.c.bf16 %v722, %v716
        %v777 = vpack.c.bf16 %v723, %v717
        %v778 = vpack.c.bf16 %v724, %v718
        %v779 = vpack.c.bf16 %v731, %v725
        %v780 = vpack.c.bf16 %v732, %v726
        %v781 = vpack.c.bf16 %v733, %v727
        %v782 = vpack.c.bf16 %v734, %v728
        %v783 = vpack.c.bf16 %v735, %v729
        %v784 = vpack.c.bf16 %v736, %v730
        %v785 = vld [vmem:[#allocation12] sm:$0x3f]
        %v786 = vpack.c.bf16 %v640, %v640
        %v788 = vlaneseq
        %v789 = vshrl.u32 %v788, 7
        %v790 = vsub.s32 0, %v789
        %v791 = vrot.slane %v785, %v790
        %v792 = vlaneseq
        %v793 = vshrl.u32 %v792, 7
        %v794 = vsub.s32 1, %v793
        %v795 = vrot.slane %v785, %v794
        %v796 = vlaneseq
        %v797 = vshrl.u32 %v796, 7
        %v798 = vsub.s32 2, %v797
        %v799 = vrot.slane %v785, %v798
        %v800 = vlaneseq
        %v801 = vshrl.u32 %v800, 7
        %v802 = vsub.s32 3, %v801
        %v803 = vrot.slane %v785, %v802
        %v804 = vlaneseq
        %v805 = vshrl.u32 %v804, 7
        %v806 = vsub.s32 4, %v805
        %v807 = vrot.slane %v785, %v806
        %v808 = vlaneseq
        %v809 = vshrl.u32 %v808, 7
        %v810 = vsub.s32 5, %v809
        %v811 = vrot.slane %v785, %v810
        %818 = vmatprep.subr.bf16.mxu0 %v738
        %819 = vmatpush1.bf16.msra.mxu0 %v737
        %820 = vmatprep.subr.bf16.mxu0 %v744
        %821 = vmatpush1.bf16.msra.mxu0 %v743
        %822 = vmatprep.subr.bf16.mxu0 %v750
        %823 = vmatpush1.bf16.msra.mxu0 %v749
        %824 = vmatprep.subr.bf16.mxu0 %v756
        %825 = vmatpush1.bf16.msra.mxu0 %v755
        %826 = vmatprep.subr.bf16.mxu0 %v762
        %827 = vmatpush1.bf16.msra.mxu0 %v761
        %828 = vmatprep.subr.bf16.mxu0 %v768
        %829 = vmatpush1.bf16.msra.mxu0 %v767
        %830 = vmatprep.subr.bf16.mxu0 %v774
        %831 = vmatpush1.bf16.msra.mxu0 %v773
        %832 = vmatprep.subr.bf16.mxu0 %v780
        %833 = vmatpush1.bf16.msra.mxu0 %v779
        %834 = vmatprep.subr.bf16.mxu0 0
        %835 = vmatpush1.bf16.msra.mxu0 0
        %836 = vmatprep.subr.bf16.mxu0 0
        %837 = vmatpush1.bf16.msra.mxu0 0
        %838 = vmatprep.subr.bf16.mxu0 0
        %839 = vmatpush1.bf16.msra.mxu0 0
        %840 = vmatprep.subr.bf16.mxu0 0
        %841 = vmatpush1.bf16.msra.mxu0 0
        %842 = vmatprep.subr.bf16.mxu0 0
        %843 = vmatpush1.bf16.msra.mxu0 0
        %844 = vmatprep.subr.bf16.mxu0 0
        %845 = vmatpush1.bf16.msra.mxu0 0
        %846 = vmatprep.subr.bf16.mxu0 0
        %847 = vmatpush1.bf16.msra.mxu0 0
        %848 = vmatprep.subr.bf16.mxu0 0
        %849 = vmatpush1.bf16.msra.mxu0 0
        %850 = vmatprep.mubr.bf16.mxu0 0
        %851 = vmatmul.mubr.bf16.gmra.mrb[0].mxu0 %v786
        %v852 = vpop.f32.mrb[0].mxu0
        %v853 = vadd.f32 %v791, %v852
        %v854 = vpop.f32.mrb[0].mxu0
        %v855 = vadd.f32 %v795, %v854
        %v856 = vpop.f32.mrb[0].mxu0
        %v857 = vpop.f32.mrb[0].mxu0
        %858 = vdwg.mxu0
        %859 = vmatprep.subr.bf16.mxu0 %v740
        %860 = vmatpush1.bf16.msra.mxu0 %v739
        %861 = vmatprep.subr.bf16.mxu0 %v746
        %862 = vmatpush1.bf16.msra.mxu0 %v745
        %863 = vmatprep.subr.bf16.mxu0 %v752
        %864 = vmatpush1.bf16.msra.mxu0 %v751
        %865 = vmatprep.subr.bf16.mxu0 %v758
        %866 = vmatpush1.bf16.msra.mxu0 %v757
        %867 = vmatprep.subr.bf16.mxu0 %v764
        %868 = vmatpush1.bf16.msra.mxu0 %v763
        %869 = vmatprep.subr.bf16.mxu0 %v770
        %870 = vmatpush1.bf16.msra.mxu0 %v769
        %871 = vmatprep.subr.bf16.mxu0 %v776
        %872 = vmatpush1.bf16.msra.mxu0 %v775
        %873 = vmatprep.subr.bf16.mxu0 %v782
        %874 = vmatpush1.bf16.msra.mxu0 %v781
        %875 = vmatprep.subr.bf16.mxu0 0
        %876 = vmatpush1.bf16.msra.mxu0 0
        %877 = vmatprep.subr.bf16.mxu0 0
        %878 = vmatpush1.bf16.msra.mxu0 0
        %879 = vmatprep.subr.bf16.mxu0 0
        %880 = vmatpush1.bf16.msra.mxu0 0
        %881 = vmatprep.subr.bf16.mxu0 0
        %882 = vmatpush1.bf16.msra.mxu0 0
        %883 = vmatprep.subr.bf16.mxu0 0
        %884 = vmatpush1.bf16.msra.mxu0 0
        %885 = vmatprep.subr.bf16.mxu0 0
        %886 = vmatpush1.bf16.msra.mxu0 0
        %887 = vmatprep.subr.bf16.mxu0 0
        %888 = vmatpush1.bf16.msra.mxu0 0
        %889 = vmatprep.subr.bf16.mxu0 0
        %890 = vmatpush1.bf16.msra.mxu0 0
        %891 = vmatprep.mubr.bf16.mxu0 0
        %892 = vmatmul.mubr.bf16.gmra.mrb[0].mxu0 %v786
        %v893 = vpop.f32.mrb[0].mxu0
        %v894 = vadd.f32 %v799, %v893
        %v895 = vpop.f32.mrb[0].mxu0
        %v896 = vadd.f32 %v803, %v895
        %v897 = vpop.f32.mrb[0].mxu0
        %v898 = vpop.f32.mrb[0].mxu0
        %899 = vdwg.mxu0
        %900 = vmatprep.subr.bf16.mxu0 %v742
        %901 = vmatpush1.bf16.msra.mxu0 %v741
        %902 = vmatprep.subr.bf16.mxu0 %v748
        %903 = vmatpush1.bf16.msra.mxu0 %v747
        %904 = vmatprep.subr.bf16.mxu0 %v754
        %905 = vmatpush1.bf16.msra.mxu0 %v753
        %906 = vmatprep.subr.bf16.mxu0 %v760
        %907 = vmatpush1.bf16.msra.mxu0 %v759
        %908 = vmatprep.subr.bf16.mxu0 %v766
        %909 = vmatpush1.bf16.msra.mxu0 %v765
        %910 = vmatprep.subr.bf16.mxu0 %v772
        %911 = vmatpush1.bf16.msra.mxu0 %v771
        %912 = vmatprep.subr.bf16.mxu0 %v778
        %913 = vmatpush1.bf16.msra.mxu0 %v777
        %914 = vmatprep.subr.bf16.mxu0 %v784
        %915 = vmatpush1.bf16.msra.mxu0 %v783
        %916 = vmatprep.subr.bf16.mxu0 0
        %917 = vmatpush1.bf16.msra.mxu0 0
        %918 = vmatprep.subr.bf16.mxu0 0
        %919 = vmatpush1.bf16.msra.mxu0 0
        %920 = vmatprep.subr.bf16.mxu0 0
        %921 = vmatpush1.bf16.msra.mxu0 0
        %922 = vmatprep.subr.bf16.mxu0 0
        %923 = vmatpush1.bf16.msra.mxu0 0
        %924 = vmatprep.subr.bf16.mxu0 0
        %925 = vmatpush1.bf16.msra.mxu0 0
        %926 = vmatprep.subr.bf16.mxu0 0
        %927 = vmatpush1.bf16.msra.mxu0 0
        %928 = vmatprep.subr.bf16.mxu0 0
        %929 = vmatpush1.bf16.msra.mxu0 0
        %930 = vmatprep.subr.bf16.mxu0 0
        %931 = vmatpush1.bf16.msra.mxu0 0
        %932 = vmatprep.mubr.bf16.mxu0 0
        %933 = vmatmul.mubr.bf16.gmra.mrb[0].mxu0 %v786
        %v934 = vpop.f32.mrb[0].mxu0
        %v935 = vadd.f32 %v807, %v934
        %v936 = vpop.f32.mrb[0].mxu0
        %v937 = vadd.f32 %v811, %v936
        %v938 = vpop.f32.mrb[0].mxu0
        %v939 = vpop.f32.mrb[0].mxu0
        %940 = vdwg.mxu0
        %v941 = vpack.c.bf16 %v853, %v853
        %v942 = vpack.c.bf16 %v855, %v855
        %v943 = vpack.c.bf16 %v894, %v894
        %v944 = vpack.c.bf16 %v896, %v896
        %v945 = vpack.c.bf16 %v935, %v935
        %v946 = vpack.c.bf16 %v937, %v937
        %v947 = vmul.bf16 %v941, 1056980736
        %v948 = vmul.bf16 %v942, 1056980736
        %v949 = vmul.bf16 %v943, 1056980736
        %v950 = vmul.bf16 %v944, 1056980736
        %v951 = vmul.bf16 %v945, 1056980736
        %v952 = vmul.bf16 %v946, 1056980736
        %v953 = vmul.bf16 %v941, 1027030327
        %v954 = vmul.bf16 %v942, 1027030327
        %v955 = vmul.bf16 %v943, 1027030327
        %v956 = vmul.bf16 %v944, 1027030327
        %v957 = vmul.bf16 %v945, 1027030327
        %v958 = vmul.bf16 %v946, 1027030327
        %v959 = vmul.bf16 %v953, %v941
        %v960 = vmul.bf16 %v954, %v942
        %v961 = vmul.bf16 %v955, %v943
        %v962 = vmul.bf16 %v956, %v944
        %v963 = vmul.bf16 %v957, %v945
        %v964 = vmul.bf16 %v958, %v946
        %v965 = vmul.bf16 %v959, %v941
        %v966 = vmul.bf16 %v960, %v942
        %v967 = vmul.bf16 %v961, %v943
        %v968 = vmul.bf16 %v962, %v944
        %v969 = vmul.bf16 %v963, %v945
        %v970 = vmul.bf16 %v964, %v946
        %v971 = vadd.bf16 %v941, %v965
        %v972 = vadd.bf16 %v942, %v966
        %v973 = vadd.bf16 %v943, %v967
        %v974 = vadd.bf16 %v944, %v968
        %v975 = vadd.bf16 %v945, %v969
        %v976 = vadd.bf16 %v946, %v970
        %v977 = vmul.bf16 %v971, 1061961548
        %v978 = vmul.bf16 %v972, 1061961548
        %v979 = vmul.bf16 %v973, 1061961548
        %v980 = vmul.bf16 %v974, 1061961548
        %v981 = vmul.bf16 %v975, 1061961548
        %v982 = vmul.bf16 %v976, 1061961548
        %v983 = vtanh.bf16.pop %v977
        %v984 = vtanh.bf16.pop %v978
        %v985 = vtanh.bf16.pop %v979
        %v986 = vtanh.bf16.pop %v980
        %v987 = vtanh.bf16.pop %v981
        %v988 = vtanh.bf16.pop %v982
        %v989 = vadd.bf16 %v983, 1065369472
        %v990 = vadd.bf16 %v984, 1065369472
        %v991 = vadd.bf16 %v985, 1065369472
        %v992 = vadd.bf16 %v986, 1065369472
        %v993 = vadd.bf16 %v987, 1065369472
        %v994 = vadd.bf16 %v988, 1065369472
        %v995 = vmul.bf16 %v947, %v989
        %v996 = vmul.bf16 %v948, %v990
        %v997 = vmul.bf16 %v949, %v991
        %v998 = vmul.bf16 %v950, %v992
        %v999 = vmul.bf16 %v951, %v993
        %v1000 = vmul.bf16 %v952, %v994
        %v1001 = vadd.bf16 %v355, %v995
        %v1002 = vadd.bf16 %v356, %v996
        %v1003 = vadd.bf16 %v357, %v997
        %v1004 = vadd.bf16 %v358, %v998
        %v1005 = vadd.bf16 %v359, %v999
        %v1006 = vadd.bf16 %v360, %v1000
        %v1013 = vunpack.c.l.b16 %v1001
        %v1014 = vunpack.c.l.b16 %v1002
        %v1015 = vunpack.c.l.b16 %v1003
        %v1016 = vunpack.c.l.b16 %v1004
        %v1017 = vunpack.c.l.b16 %v1005
        %v1018 = vunpack.c.l.b16 %v1006
        %v1019 = vpack.c.b16 %v1014, %v1013
        %v1020 = vpack.c.b16 %v1016, %v1015
        %v1021 = vpack.c.b16 %v1018, %v1017
        %1025 = vst [vmem:[%s339] sm:$0xff] %v1019
        %1026 = vst [vmem:[%s339 + $0x8] sm:$0xff] %v1020
        %1027 = vst [vmem:[%s339 + $0x10] sm:$0xff] %v1021
        %s1028 = sand.u32 %s172, 1
        %s1029 = scalar_lea.sflag [#allocation6], %s1028
        %s1030 = sand.u32 %s172, 1
        %s1031 = smul.addr %s1030, 24
        %s1032 = scalar_lea.vmem [#allocation13], %s1031
        // Predicated region
        $region61: #{_moe_forward_flat.1} parent=39 // pred_check
          %p1033 = pneg %p182
        $region62: #{_moe_forward_flat.1} parent=39 // pred_check_branch
          %1035 = sbr.rel (%p1033) target = $region64
        $region63: #{_moe_forward_flat.1} parent=39 // pred_region
          %s1037 = ssub.s32 384, 384
          %1038 = vsyncadd %s1029, %s1037
          %s1039 = smul.addr %s26, 6
          %s1040 = smul.addr %s1039, 64
          %s1041 = scalar_lea.hbm %s6, %s1040
          %s1043 = sshll.u32 %s1032, 4
          %s1044 = int_to_ptr.vmem [resolvable:$true] %s1043
          %1046 = dma.vmem_to_hbm [thread:$0]  %s1044, 384, %s1041, %s1029
        $region64: #{_moe_forward_flat.1} parent=39 // pred_fallthru
          _
      $region40: #{_moe_forward_flat.1} parent=5 // pred_fallthru
        _
      %p1047 = scmp.le.s32.totalorder 2, %s21
      // Predicated region
      $region65: #{_moe_forward_flat.1} parent=5 // pred_check
        %p1048 = pneg %p1047
      $region66: #{_moe_forward_flat.1} parent=5 // pred_check_branch
        %1050 = sbr.rel (%p1048) target = $region68
      $region67: #{_moe_forward_flat.1} parent=5 // pred_region
        %s1051 = ssub.s32 %s21, 2
        // Predicated region
        $region69: #{_moe_forward_flat.1} parent=67 // pred_check
          %p1052 = pneg %p188
        $region70: #{_moe_forward_flat.1} parent=67 // pred_check_branch
          %1054 = sbr.rel (%p1052) target = $region72
        $region71: #{_moe_forward_flat.1} parent=67 // pred_region
          %s1055 = sand.u32 %s173, 1
          %s1056 = scalar_lea.sflag [#allocation6], %s1055
          %s1057 = sand.u32 %s173, 1
          %s1058 = smul.addr %s1057, 24
          %s1059 = scalar_lea.vmem [#allocation13], %s1058
          %1060 = dma.done %s1056, 384
        $region72: #{_moe_forward_flat.1} parent=67 // pred_fallthru
          _
      $region68: #{_moe_forward_flat.1} parent=5 // pred_fallthru
        _
    $region6: #{_moe_forward_flat.1} parent=1 // loop_footer
      %s25 = sadd.s32 1, %s21
    $region7: #{_moe_forward_flat.1} parent=1 // loop_footer_branch
      %20 = sbr.rel target = $region3
    $region8: #{_moe_forward_flat.1} parent=1 // loop_exit
      _
    %1061 = vsyncpa [#allocation5], 1
    %s1062 = scalar_lea.sflag [#allocation5], 1
    %1063 = vsyncpa %s1062, 1
    %1064 = vsyncpa [#allocation8], 1
    %1065 = vsyncpa [#allocation11], 1
    %1066 = vsyncpa [#allocation6], 1
    %s1067 = scalar_lea.sflag [#allocation6], 1
    %1068 = vsyncpa %s1067, 1

</llo_original>
